<compile_context>
chip_gen: v5e
topology: v5e:2x2
jax: 0.10.0
libtpu: 0.0.40
codegen_flags: <defaults>
</compile_context>

<pallas_src>
import jax
import jax.numpy as jnp
from jax.experimental import pallas as pl
from jax.experimental.pallas import tpu as pltpu


def _mlp_kernel(x_ref, w1_ref, b1_ref, w2_ref, b2_ref, w3_ref, b3_ref, o_ref):
    # Cast the f32 x tile to the weight dtype in-registers (bf16 by default):
    # single-pass MXU inputs on v5e/v6e/v7x, f32 accumulation via
    # preferred_element_type. Bias / ReLU stay f32 (v5e-safe epilogue).
    x = x_ref[...].astype(w1_ref.dtype)
    h1 = jnp.dot(x, w1_ref[...], preferred_element_type=jnp.float32) + b1_ref[...]
    h1 = jnp.maximum(h1, 0.0).astype(w2_ref.dtype)
    h2 = jnp.dot(h1, w2_ref[...], preferred_element_type=jnp.float32) + b2_ref[...]
    h2 = jnp.maximum(h2, 0.0).astype(w3_ref.dtype)
    out = jnp.dot(h2, w3_ref[...], preferred_element_type=jnp.float32) + b3_ref[...]
    o_ref[...] = out.astype(o_ref.dtype)


def _cdiv(a, b):
    return -(-a // b)


def _round_up(x, m):
    return ((x + m - 1) // m) * m


def _num_tensorcores():
    """Best-effort TensorCore-per-chip count (2 on v7x, 1 on v5e/v6e)."""
    try:
        info = pltpu.get_tpu_info()
        for attr in ("num_tensorcores", "tensorcore_count", "num_cores",
                     "cores_per_chip"):
            v = getattr(info, attr, None)
            if isinstance(v, int) and v > 0:
                return v
    except Exception:
        pass
    return 1


def _choose_tile(batch, tile_b_max):
    """Batch tile: multiple of 8, fitted to the batch to minimize padded-row
    MXU waste, and (on multi-TC chips only) a step count that load-balances
    across TensorCores."""
    tb_max = max(8, _round_up(int(tile_b_max), 8))
    n_steps = max(1, _cdiv(batch, tb_max))
    cores = _num_tensorcores()
    if cores > 1 and batch > 8 * cores:
        # v7x: make the "parallel" batch axis a multiple of the TC count so
        # both cores get equal work. On 1-TC parts this branch is skipped
        # (an extra grid step would only add ~0.35us overhead).
        n_steps = _cdiv(max(n_steps, cores), cores) * cores
    return _round_up(_cdiv(batch, n_steps), 8)


def behavior_cloning_forward(x, params, *, tile_b=2048, use_bf16=True):
    """x: [B, input_dim] float32. params: w1,b1,w2,b2,w3,b3 (w: [in,out], b: [1,out])."""
    B, d_in = x.shape
    w1, b1 = params["w1"], params["b1"]   # [d_in, 128], [1, 128]
    w2, b2 = params["w2"], params["b2"]   # [128, 64],   [1, 64]
    w3, b3 = params["w3"], params["b3"]   # [64, d_out], [1, d_out]
    d_out = w3.shape[1]

    tb = _choose_tile(B, tile_b)
    grid = (_cdiv(B, tb),)

    # Weights: one-time cast (tiny), resident in VMEM via constant index_maps.
    mm_dtype = jnp.bfloat16 if use_bf16 else jnp.float32
    w1k, w2k, w3k = w1.astype(mm_dtype), w2.astype(mm_dtype), w3.astype(mm_dtype)
    b1k, b2k, b3k = (b1.astype(jnp.float32), b2.astype(jnp.float32),
                     b3.astype(jnp.float32))

    # Rough VMEM estimate (lane-padded to 128, double-buffered x/out + f32
    # temporaries); only override the scoped limit if tiles get really big
    # (matters on v7x's 32 MiB default / 64 MiB physical).
    lane = 128
    est_bytes = (tb * _round_up(d_in, lane) * 4 * 2          # x tile (f32) x2
                 + tb * _round_up(d_out, lane) * 4 * 2       # out tile x2
                 + tb * lane * 4 * 3)                        # h1/h2/out temporaries
    vmem_limit = int(min(est_bytes * 2, 60 * 1024 * 1024)) if est_bytes > (16 << 20) else None

    full = lambda a: pl.BlockSpec(a.shape, lambda i: (0, 0))

    out = pl.pallas_call(
        _mlp_kernel,
        out_shape=jax.ShapeDtypeStruct((B, d_out), jnp.float32),
        grid_spec=pltpu.PrefetchScalarGridSpec(
            num_scalar_prefetch=0,
            grid=grid,
            in_specs=[
                pl.BlockSpec((tb, d_in), lambda i: (i, 0)),   # x tile (ragged tail masked by Pallas)
                full(w1k), full(b1k),
                full(w2k), full(b2k),
                full(w3k), full(b3k),
            ],
            out_specs=pl.BlockSpec((tb, d_out), lambda i: (i, 0)),
        ),
        compiler_params=pltpu.CompilerParams(
            dimension_semantics=("parallel",),   # batch tiles are independent
            vmem_limit_bytes=vmem_limit,
        ),
    )(x, w1k, b1k, w2k, b2k, w3k, b3k)

    return out


def init_params(key, input_dim, output_dim):
    """Deterministic init mimicking nn.Linear's U(-1/sqrt(fan_in), 1/sqrt(fan_in))."""
    ks = jax.random.split(key, 6)

    def linear(kw, kb, fan_in, fan_out):
        bound = 1.0 / jnp.sqrt(fan_in)
        w = jax.random.uniform(kw, (fan_in, fan_out), jnp.float32, -bound, bound)
        b = jax.random.uniform(kb, (1, fan_out), jnp.float32, -bound, bound)
        return w, b

    w1, b1 = linear(ks[0], ks[1], input_dim, 128)
    w2, b2 = linear(ks[2], ks[3], 128, 64)
    w3, b3 = linear(ks[4], ks[5], 64, output_dim)
    return {"w1": w1, "b1": b1, "w2": w2, "b2": b2, "w3": w3, "b3": b3}


def _reference(x, params):
    h1 = jnp.maximum(x @ params["w1"] + params["b1"], 0.0)
    h2 = jnp.maximum(h1 @ params["w2"] + params["b2"], 0.0)
    return h2 @ params["w3"] + params["b3"]


if __name__ == "__main__":
    key = jax.random.PRNGKey(0)
    k_x, k_p, k_x2, k_x3 = jax.random.split(key, 4)

    batch, input_dim, output_dim = 16, 32, 8
    x = jax.random.normal(k_x, (batch, input_dim), jnp.float32)
    params = init_params(k_p, input_dim, output_dim)
    ref = _reference(x, params)

    # Default fast path: bf16 matmuls, f32 accumulation / bias / ReLU.
    out = jax.block_until_ready(behavior_cloning_forward(x, params))
    assert out.shape == (batch, output_dim)
    assert jnp.allclose(out, ref, atol=1e-1, rtol=5e-2)

    # Precise f32 path (matches the PyTorch module to MXU f32-matmul accuracy).
    out_f32 = jax.block_until_ready(behavior_cloning_forward(x, params, use_bf16=False))
    assert jnp.allclose(out_f32, ref, atol=1e-5, rtol=1e-5)

    # Ragged batch (not a multiple of 8): exercises the masked tail, no jnp.pad.
    x2 = jax.random.normal(k_x2, (20, input_dim), jnp.float32)
    out2 = jax.block_until_ready(behavior_cloning_forward(x2, params, use_bf16=False))
    assert out2.shape == (20, output_dim)
    assert jnp.allclose(out2, _reference(x2, params), atol=1e-5, rtol=1e-5)

    # Multi-step grid with a ragged last tile (tile_b forced small).
    x3 = jax.random.normal(k_x3, (40, input_dim), jnp.float32)
    out3 = jax.block_until_ready(
        behavior_cloning_forward(x3, params, tile_b=16, use_bf16=False))
    assert out3.shape == (40, output_dim)
    assert jnp.allclose(out3, _reference(x3, params), atol=1e-5, rtol=1e-5)

    print("KERNEL_OK")
</pallas_src>

<mosaic_0001>
module attributes {stable_mosaic.version = 11 : i64} {
  func.func @_mlp_kernel(%arg0: i32, %arg1: memref<16x32xf32, #tpu.memory_space<vmem>>, %arg2: memref<32x128xbf16, #tpu.memory_space<vmem>>, %arg3: memref<1x128xf32, #tpu.memory_space<vmem>>, %arg4: memref<128x64xbf16, #tpu.memory_space<vmem>>, %arg5: memref<1x64xf32, #tpu.memory_space<vmem>>, %arg6: memref<64x8xbf16, #tpu.memory_space<vmem>>, %arg7: memref<1x8xf32, #tpu.memory_space<vmem>>, %arg8: memref<16x8xf32, #tpu.memory_space<vmem>>) attributes {dimension_semantics = [#tpu.dimension_semantics<parallel>], iteration_bounds = array<i64: 1>, scalar_prefetch = 0 : i64, scratch_operands = 0 : i64, tpu.core_type = #tpu.core_type<tc>, window_params = [{transform_indices = @transform_0, window_bounds = array<i64: 16, 32>}, {pipeline_mode = #tpu.pipeline_mode<synchronous>, transform_indices = @transform_1, window_bounds = array<i64: 32, 128>}, {pipeline_mode = #tpu.pipeline_mode<synchronous>, transform_indices = @transform_2, window_bounds = array<i64: 1, 128>}, {pipeline_mode = #tpu.pipeline_mode<synchronous>, transform_indices = @transform_3, window_bounds = array<i64: 128, 64>}, {pipeline_mode = #tpu.pipeline_mode<synchronous>, transform_indices = @transform_4, window_bounds = array<i64: 1, 64>}, {pipeline_mode = #tpu.pipeline_mode<synchronous>, transform_indices = @transform_5, window_bounds = array<i64: 64, 8>}, {pipeline_mode = #tpu.pipeline_mode<synchronous>, transform_indices = @transform_6, window_bounds = array<i64: 1, 8>}, {transform_indices = @transform_7, window_bounds = array<i64: 16, 8>}]} {
    %c0 = arith.constant 0 : index
    %c0_0 = arith.constant 0 : index
    %0 = vector.load %arg1[%c0, %c0_0] : memref<16x32xf32, #tpu.memory_space<vmem>>, vector<16x32xf32>
    %1 = arith.truncf %0 : vector<16x32xf32> to vector<16x32xbf16>
    %c0_1 = arith.constant 0 : index
    %c0_2 = arith.constant 0 : index
    %2 = vector.load %arg2[%c0_1, %c0_2] : memref<32x128xbf16, #tpu.memory_space<vmem>>, vector<32x128xbf16>
    %cst = arith.constant dense<0.000000e+00> : vector<16x128xf32>
    %3 = tpu.matmul %1, %2, %cst {dimension_numbers = #tpu.dot_dimension_numbers<[1], [0], [0], [1], [0, 0, 1, 1], [], []>} : vector<16x32xbf16>, vector<32x128xbf16>, vector<16x128xf32> -> vector<16x128xf32>
    %c0_3 = arith.constant 0 : index
    %c0_4 = arith.constant 0 : index
    %4 = vector.load %arg3[%c0_3, %c0_4] : memref<1x128xf32, #tpu.memory_space<vmem>>, vector<1x128xf32>
    %5 = vector.broadcast %4 : vector<1x128xf32> to vector<16x128xf32>
    %6 = arith.addf %3, %5 : vector<16x128xf32>
    %cst_5 = arith.constant 0.000000e+00 : f32
    %7 = vector.broadcast %cst_5 : f32 to vector<16x128xf32>
    %8 = arith.maximumf %6, %7 : vector<16x128xf32>
    %9 = arith.truncf %8 : vector<16x128xf32> to vector<16x128xbf16>
    %c0_6 = arith.constant 0 : index
    %c0_7 = arith.constant 0 : index
    %10 = vector.load %arg4[%c0_6, %c0_7] : memref<128x64xbf16, #tpu.memory_space<vmem>>, vector<128x64xbf16>
    %cst_8 = arith.constant dense<0.000000e+00> : vector<16x64xf32>
    %11 = tpu.matmul %9, %10, %cst_8 {dimension_numbers = #tpu.dot_dimension_numbers<[1], [0], [0], [1], [0, 0, 1, 1], [], []>} : vector<16x128xbf16>, vector<128x64xbf16>, vector<16x64xf32> -> vector<16x64xf32>
    %c0_9 = arith.constant 0 : index
    %c0_10 = arith.constant 0 : index
    %12 = vector.load %arg5[%c0_9, %c0_10] : memref<1x64xf32, #tpu.memory_space<vmem>>, vector<1x64xf32>
    %13 = vector.broadcast %12 : vector<1x64xf32> to vector<16x64xf32>
    %14 = arith.addf %11, %13 : vector<16x64xf32>
    %cst_11 = arith.constant 0.000000e+00 : f32
    %15 = vector.broadcast %cst_11 : f32 to vector<16x64xf32>
    %16 = arith.maximumf %14, %15 : vector<16x64xf32>
    %17 = arith.truncf %16 : vector<16x64xf32> to vector<16x64xbf16>
    %c0_12 = arith.constant 0 : index
    %c0_13 = arith.constant 0 : index
    %18 = vector.load %arg6[%c0_12, %c0_13] : memref<64x8xbf16, #tpu.memory_space<vmem>>, vector<64x8xbf16>
    %cst_14 = arith.constant dense<0.000000e+00> : vector<16x8xf32>
    %19 = tpu.matmul %17, %18, %cst_14 {dimension_numbers = #tpu.dot_dimension_numbers<[1], [0], [0], [1], [0, 0, 1, 1], [], []>} : vector<16x64xbf16>, vector<64x8xbf16>, vector<16x8xf32> -> vector<16x8xf32>
    %c0_15 = arith.constant 0 : index
    %c0_16 = arith.constant 0 : index
    %20 = vector.load %arg7[%c0_15, %c0_16] : memref<1x8xf32, #tpu.memory_space<vmem>>, vector<1x8xf32>
    %21 = vector.broadcast %20 : vector<1x8xf32> to vector<16x8xf32>
    %22 = arith.addf %19, %21 : vector<16x8xf32>
    %c0_17 = arith.constant 0 : index
    %c0_18 = arith.constant 0 : index
    %23 = vector.load %arg8[%c0_17, %c0_18] : memref<16x8xf32, #tpu.memory_space<vmem>>, vector<16x8xf32>
    tpu.vector_store %arg8[%c0_17, %c0_18], %22 {strides = array<i32>} : memref<16x8xf32, #tpu.memory_space<vmem>>, vector<16x8xf32>,
    return
  }
  func.func @transform_0(%arg0: i32) -> (i32, i32) {
    %c0_i32 = arith.constant 0 : i32
    %c0_i32_0 = arith.constant 0 : i32
    return %arg0, %c0_i32 : i32, i32
  }
  func.func @transform_1(%arg0: i32) -> (i32, i32) {
    %c0_i32 = arith.constant 0 : i32
    %c0_i32_0 = arith.constant 0 : i32
    %c0_i32_1 = arith.constant 0 : i32
    return %c0_i32, %c0_i32_0 : i32, i32
  }
  func.func @transform_2(%arg0: i32) -> (i32, i32) {
    %c0_i32 = arith.constant 0 : i32
    %c0_i32_0 = arith.constant 0 : i32
    %c0_i32_1 = arith.constant 0 : i32
    return %c0_i32, %c0_i32_0 : i32, i32
  }
  func.func @transform_3(%arg0: i32) -> (i32, i32) {
    %c0_i32 = arith.constant 0 : i32
    %c0_i32_0 = arith.constant 0 : i32
    %c0_i32_1 = arith.constant 0 : i32
    return %c0_i32, %c0_i32_0 : i32, i32
  }
  func.func @transform_4(%arg0: i32) -> (i32, i32) {
    %c0_i32 = arith.constant 0 : i32
    %c0_i32_0 = arith.constant 0 : i32
    %c0_i32_1 = arith.constant 0 : i32
    return %c0_i32, %c0_i32_0 : i32, i32
  }
  func.func @transform_5(%arg0: i32) -> (i32, i32) {
    %c0_i32 = arith.constant 0 : i32
    %c0_i32_0 = arith.constant 0 : i32
    %c0_i32_1 = arith.constant 0 : i32
    return %c0_i32, %c0_i32_0 : i32, i32
  }
  func.func @transform_6(%arg0: i32) -> (i32, i32) {
    %c0_i32 = arith.constant 0 : i32
    %c0_i32_0 = arith.constant 0 : i32
    %c0_i32_1 = arith.constant 0 : i32
    return %c0_i32, %c0_i32_0 : i32, i32
  }
  func.func @transform_7(%arg0: i32) -> (i32, i32) {
    %c0_i32 = arith.constant 0 : i32
    %c0_i32_0 = arith.constant 0 : i32
    return %arg0, %c0_i32 : i32, i32
  }
}

</mosaic_0001>

<llo_original>
// kernel: tpu_custom_call.1
$region0: #{tpu_custom_call.1}
  #allocation0 [shape = 'u32[]', space=smem, size = 0x4, offset = 0x4, fixed_abs, tag = 'smem constant byte address 0x4 - core index']
  #allocation1 [shape = 'u32[72,128]{1,0:T(1,128)}', space=vmem, size = 0x9000, scoped, tag = 'internal scratch']
  %s0 = inlined_call_operand.vmem [shape: f32[16,32], index: 0, kind: input, shape index: {}]
  %s1 = inlined_call_operand.vmem [shape: bf16[32,128], index: 1, kind: input, shape index: {}]
  %s2 = inlined_call_operand.vmem [shape: f32[1,128], index: 2, kind: input, shape index: {}]
  %s3 = inlined_call_operand.vmem [shape: bf16[128,64], index: 3, kind: input, shape index: {}]
  %s4 = inlined_call_operand.vmem [shape: f32[1,64], index: 4, kind: input, shape index: {}]
  %s5 = inlined_call_operand.vmem [shape: bf16[64,8], index: 5, kind: input, shape index: {}]
  %s6 = inlined_call_operand.vmem [shape: f32[1,8], index: 6, kind: input, shape index: {}]
  %s7 = inlined_call_operand.vmem [shape: f32[16,8], index: 7, kind: output, shape index: {}]
  %s8 = sld [smem:[#allocation0]]
  $region38: #{tpu_custom_call.1} parent=0
    _
  %s10 = ssub.s32 1, %s8
  %s11 = scalar_select 0, %s10, %s8
  // Predicated region
  $region2: #{tpu_custom_call.1} parent=0 // pred_check
    _
  $region3: #{tpu_custom_call.1} parent=0 // pred_check_branch
    %13 = sbr.rel (0) target = $region5
  $region4: #{tpu_custom_call.1} parent=0 // pred_region
    _
  $region5: #{tpu_custom_call.1} parent=0 // pred_fallthru
    _
  // Predicated region
  $region6: #{tpu_custom_call.1} parent=0 // pred_check
    _
  $region7: #{tpu_custom_call.1} parent=0 // pred_check_branch
    %15 = sbr.rel (0) target = $region9
  $region8: #{tpu_custom_call.1} parent=0 // pred_region
    _
  $region9: #{tpu_custom_call.1} parent=0 // pred_fallthru
    _
  // Predicated region
  $region10: #{tpu_custom_call.1} parent=0 // pred_check
    _
  $region11: #{tpu_custom_call.1} parent=0 // pred_check_branch
    %17 = sbr.rel (0) target = $region13
  $region12: #{tpu_custom_call.1} parent=0 // pred_region
    _
  $region13: #{tpu_custom_call.1} parent=0 // pred_fallthru
    _
  // Predicated region
  $region14: #{tpu_custom_call.1} parent=0 // pred_check
    _
  $region15: #{tpu_custom_call.1} parent=0 // pred_check_branch
    %19 = sbr.rel (0) target = $region17
  $region16: #{tpu_custom_call.1} parent=0 // pred_region
    _
  $region17: #{tpu_custom_call.1} parent=0 // pred_fallthru
    _
  // Predicated region
  $region18: #{tpu_custom_call.1} parent=0 // pred_check
    _
  $region19: #{tpu_custom_call.1} parent=0 // pred_check_branch
    %21 = sbr.rel (0) target = $region21
  $region20: #{tpu_custom_call.1} parent=0 // pred_region
    _
  $region21: #{tpu_custom_call.1} parent=0 // pred_fallthru
    _
  // Predicated region
  $region22: #{tpu_custom_call.1} parent=0 // pred_check
    _
  $region23: #{tpu_custom_call.1} parent=0 // pred_check_branch
    %23 = sbr.rel (0) target = $region25
  $region24: #{tpu_custom_call.1} parent=0 // pred_region
    _
  $region25: #{tpu_custom_call.1} parent=0 // pred_fallthru
    _
  // Predicated region
  $region26: #{tpu_custom_call.1} parent=0 // pred_check
    _
  $region27: #{tpu_custom_call.1} parent=0 // pred_check_branch
    %25 = sbr.rel (0) target = $region29
  $region28: #{tpu_custom_call.1} parent=0 // pred_region
    _
  $region29: #{tpu_custom_call.1} parent=0 // pred_fallthru
    _
  %v27 = vld [vmem:[%s0] sm:$0xff]
  %v28 = vld [vmem:[%s0 + $0x8] sm:$0xff]
  %v29 = vpack.c.bf16 %v28, %v27
  %v30 = vld [vmem:[%s1] sm:$0xf]
  %v31 = vld [vmem:[%s1 + $0x4] sm:$0xf]
  %v32 = vld [vmem:[%s1 + $0x8] sm:$0xf]
  %v33 = vld [vmem:[%s1 + $0xc] sm:$0xf]
  %v34 = vld [vmem:[%s2] sm:$0x1]
  %v36 = vperm.slane %v34, 0
  %v42 = vunpack.c.l.b16 %v30
  %v43 = vunpack.c.l.b16 %v31
  %v44 = vunpack.c.l.b16 %v32
  %v45 = vunpack.c.l.b16 %v33
  %v46 = vpack.c.b16 %v43, %v42
  %v47 = vpack.c.b16 %v45, %v44
  %vm50 = vcmask 261120
  %v52 = vsel %vm50, %v29, 0
  %54 = vmatpush.bf16.msra.mxu0 0
  %55 = vmatpush.bf16.msra.mxu0 0
  %56 = vmatpush.bf16.msra.mxu0 0
  %57 = vmatpush.bf16.msra.mxu0 0
  %58 = vmatpush.bf16.msra.mxu0 0
  %59 = vmatpush.bf16.msra.mxu0 0
  %60 = vmatpush.bf16.msra.mxu0 %v47
  %61 = vmatpush.bf16.msra.mxu0 %v46
  %62 = vmatmul.bf16.gmra.mxu0 %v52
  %v63 = vpop.f32.mrf.mxu0
  %v64 = vadd.f32 %v36, %v63
  %v65 = vpop.f32.mrf.mxu0
  %v66 = vadd.f32 %v36, %v65
  %67 = vdwg.mxu0
  %v68 = vmax.f32 %v64, 0.0
  %v69 = vmax.f32 %v66, 0.0
  %v70 = vpack.c.bf16 %v69, %v68
  %v71 = vld [vmem:[%s3] sm:$0xf]
  %v72 = vld [vmem:[%s3 + $0x4] sm:$0xf]
  %v73 = vld [vmem:[%s3 + $0x8] sm:$0xf]
  %v74 = vld [vmem:[%s3 + $0xc] sm:$0xf]
  %v75 = vld [vmem:[%s3 + $0x10] sm:$0xf]
  %v76 = vld [vmem:[%s3 + $0x14] sm:$0xf]
  %v77 = vld [vmem:[%s3 + $0x18] sm:$0xf]
  %v78 = vld [vmem:[%s3 + $0x1c] sm:$0xf]
  %v79 = vld [vmem:[%s3 + $0x20] sm:$0xf]
  %v80 = vld [vmem:[%s3 + $0x24] sm:$0xf]
  %v81 = vld [vmem:[%s3 + $0x28] sm:$0xf]
  %v82 = vld [vmem:[%s3 + $0x2c] sm:$0xf]
  %v83 = vld [vmem:[%s3 + $0x30] sm:$0xf]
  %v84 = vld [vmem:[%s3 + $0x34] sm:$0xf]
  %v85 = vld [vmem:[%s3 + $0x38] sm:$0xf]
  %v86 = vld [vmem:[%s3 + $0x3c] sm:$0xf]
  %v87 = vld [vmem:[%s4] sm:$0x1]
  %v89 = vperm.slane %v87, 0
  %v107 = vunpack.c.l.b16 %v71
  %v108 = vunpack.c.l.b16 %v72
  %v109 = vunpack.c.l.b16 %v73
  %v110 = vunpack.c.l.b16 %v74
  %v111 = vunpack.c.l.b16 %v75
  %v112 = vunpack.c.l.b16 %v76
  %v113 = vunpack.c.l.b16 %v77
  %v114 = vunpack.c.l.b16 %v78
  %v115 = vunpack.c.l.b16 %v79
  %v116 = vunpack.c.l.b16 %v80
  %v117 = vunpack.c.l.b16 %v81
  %v118 = vunpack.c.l.b16 %v82
  %v119 = vunpack.c.l.b16 %v83
  %v120 = vunpack.c.l.b16 %v84
  %v121 = vunpack.c.l.b16 %v85
  %v122 = vunpack.c.l.b16 %v86
  %v123 = vpack.c.b16 %v108, %v107
  %v124 = vpack.c.b16 %v110, %v109
  %v125 = vpack.c.b16 %v112, %v111
  %v126 = vpack.c.b16 %v114, %v113
  %v127 = vpack.c.b16 %v116, %v115
  %v128 = vpack.c.b16 %v118, %v117
  %v129 = vpack.c.b16 %v120, %v119
  %v130 = vpack.c.b16 %v122, %v121
  %139 = vmatpush.bf16.msra.mxu0 %v130
  %140 = vmatpush.bf16.msra.mxu0 %v129
  %141 = vmatpush.bf16.msra.mxu0 %v128
  %142 = vmatpush.bf16.msra.mxu0 %v127
  %143 = vmatpush.bf16.msra.mxu0 %v126
  %144 = vmatpush.bf16.msra.mxu0 %v125
  %145 = vmatpush.bf16.msra.mxu0 %v124
  %146 = vmatpush.bf16.msra.mxu0 %v123
  %147 = vmatmul.bf16.gmra.mxu0 %v70
  %v148 = vpop.f32.mrf.mxu0
  %v149 = vadd.f32 %v89, %v148
  %v150 = vpop.f32.mrf.mxu0
  %v151 = vadd.f32 %v89, %v150
  %152 = vdwg.mxu0
  %v153 = vmax.f32 %v149, 0.0
  %v154 = vmax.f32 %v151, 0.0
  %v155 = vpack.c.bf16 %v154, %v153
  %v156 = vld [vmem:[%s5] sm:$0xf]
  %v157 = vld [vmem:[%s5 + $0x4] sm:$0xf]
  %v158 = vld [vmem:[%s5 + $0x8] sm:$0xf]
  %v159 = vld [vmem:[%s5 + $0xc] sm:$0xf]
  %v160 = vld [vmem:[%s5 + $0x10] sm:$0xf]
  %v161 = vld [vmem:[%s5 + $0x14] sm:$0xf]
  %v162 = vld [vmem:[%s5 + $0x18] sm:$0xf]
  %v163 = vld [vmem:[%s5 + $0x1c] sm:$0xf]
  %v164 = vld [vmem:[%s6] sm:$0x1]
  %v166 = vperm.slane %v164, 0
  %v176 = vunpack.c.l.b16 %v156
  %v177 = vunpack.c.l.b16 %v157
  %v178 = vunpack.c.l.b16 %v158
  %v179 = vunpack.c.l.b16 %v159
  %v180 = vunpack.c.l.b16 %v160
  %v181 = vunpack.c.l.b16 %v161
  %v182 = vunpack.c.l.b16 %v162
  %v183 = vunpack.c.l.b16 %v163
  %v184 = vpack.c.b16 %v177, %v176
  %v185 = vpack.c.b16 %v179, %v178
  %v186 = vpack.c.b16 %v181, %v180
  %v187 = vpack.c.b16 %v183, %v182
  %vm192 = vcmask 523264
  %v194 = vsel %vm192, %v155, 0
  %196 = vmatpush.bf16.msra.mxu0 0
  %197 = vmatpush.bf16.msra.mxu0 0
  %198 = vmatpush.bf16.msra.mxu0 0
  %199 = vmatpush.bf16.msra.mxu0 0
  %200 = vmatpush.bf16.msra.mxu0 %v187
  %201 = vmatpush.bf16.msra.mxu0 %v186
  %202 = vmatpush.bf16.msra.mxu0 %v185
  %203 = vmatpush.bf16.msra.mxu0 %v184
  %204 = vmatmul.bf16.gmra.mxu0 %v194
  %v205 = vpop.f32.mrf.mxu0
  %v206 = vadd.f32 %v166, %v205
  %v207 = vpop.f32.mrf.mxu0
  %v208 = vadd.f32 %v166, %v207
  %209 = vdwg.mxu0
  %vm210 = vcmask 64512
  %211 = vst.msk [vmem:[%s7] sm:$0xff] %vm210, %v206
  %212 = vst.msk [vmem:[%s7 + $0x8] sm:$0xff] %vm210, %v208
  // Predicated region
  $region30: #{tpu_custom_call.1} parent=0 // pred_check
    _
  $region31: #{tpu_custom_call.1} parent=0 // pred_check_branch
    %214 = sbr.rel (0) target = $region33
  $region32: #{tpu_custom_call.1} parent=0 // pred_region
    _
  $region33: #{tpu_custom_call.1} parent=0 // pred_fallthru
    _
  // Predicated region
  $region34: #{tpu_custom_call.1} parent=0 // pred_check
    _
  $region35: #{tpu_custom_call.1} parent=0 // pred_check_branch
    %216 = sbr.rel (0) target = $region37
  $region36: #{tpu_custom_call.1} parent=0 // pred_region
    _
  $region37: #{tpu_custom_call.1} parent=0 // pred_fallthru
    _

</llo_original>
